<compile_context>
chip_gen: v7x
topology: tpu7x:2x2x1
jax: 0.10.0
libtpu: 0.0.40
codegen_flags: <defaults>
</compile_context>

<pallas_src>
import functools

import jax
import jax.numpy as jnp
from jax import lax
from jax.experimental import pallas as pl
from jax.experimental.pallas import tpu as pltpu


def nsp_head_kernel(x_ref, w_ref, b_ref, o_ref):
    # x_ref: [TB, H] (VMEM), w_ref: [L, H] (VMEM, resident across grid),
    # b_ref: [L]     (SMEM scalars), o_ref: [TB, L]
    x = x_ref[...]
    w = w_ref[...]
    # Contract over H (last dim of both operands) -> [TB, L], f32 accumulate on MXU.
    acc = lax.dot_general(
        x, w,
        dimension_numbers=(((1,), (1,)), ((), ())),
        preferred_element_type=jnp.float32,
    )
    # Bias add from SMEM scalars (L is tiny, e.g. num_labels=2): build the
    # broadcast bias row once with an iota mask, single dense store at the end.
    num_labels = o_ref.shape[-1]
    lane_idx = lax.broadcasted_iota(jnp.int32, acc.shape, 1)
    bias_bcast = jnp.zeros_like(acc)
    for l in range(num_labels):
        bias_bcast = bias_bcast + jnp.where(lane_idx == l, b_ref[l], 0.0)
    o_ref[...] = (acc + bias_bcast).astype(o_ref.dtype)


@functools.partial(jax.jit, static_argnames=("tb",))
def nsp_prediction_head(pooled_output, weight, bias, *, tb=512):
    """pooled_output: [B, H]; weight: [L, H] (PyTorch nn.Linear layout); bias: [L]."""
    B, H = pooled_output.shape
    L = weight.shape[0]

    # Batch tile: large sublane-dense block for streaming x from HBM; either
    # TB == B (full extent, any B) or TB == tb (multiple of 8). At B=2 this is
    # a single grid step, but the same kernel scales to inference batches.
    TB = B if B <= tb else tb
    grid = (pl.cdiv(B, TB),)

    cost = pl.CostEstimate(
        flops=2 * B * H * L,
        transcendentals=0,
        bytes_accessed=4 * (B * H + L * H + B * L),
    )

    return pl.pallas_call(
        nsp_head_kernel,
        out_shape=jax.ShapeDtypeStruct((B, L), pooled_output.dtype),
        grid_spec=pltpu.PrefetchScalarGridSpec(
            num_scalar_prefetch=0,
            grid=grid,
            in_specs=[
                # x: tiled over the batch, H stays whole on lanes.
                pl.BlockSpec((TB, H), lambda i: (i, 0)),
                # weight: full extent, resident across all grid steps.
                pl.BlockSpec((L, H), lambda i: (0, 0)),
                # bias: tiny -> whole array in SMEM, added as scalars (no VMEM tile).
                pl.BlockSpec(memory_space=pltpu.MemorySpace.SMEM),
            ],
            out_specs=pl.BlockSpec((TB, L), lambda i: (i, 0)),
        ),
        compiler_params=pltpu.CompilerParams(
            # Batch axis is independent -> shard grid steps across both v7x TCs.
            dimension_semantics=("parallel",),
        ),
        cost_estimate=cost,
    )(pooled_output, weight, bias)
    # TODO(synk): at full BERT scale this head should be fused into the upstream
    # pooler kernel (tanh(dense)) to avoid an HBM round-trip of pooled_output.


if __name__ == "__main__":
    # Small shapes consistent with the module: batch=2, hidden=32, num_labels=2
    B, H, L = 2, 32, 2
    key = jax.random.PRNGKey(0)
    k_x, k_w, k_b = jax.random.split(key, 3)

    pooled_output = jax.random.normal(k_x, (B, H), dtype=jnp.float32)
    # nn.Linear(hidden_size, num_labels): weight [L, H], bias [L]
    weight = jax.random.normal(k_w, (L, H), dtype=jnp.float32) * 0.02
    bias = jax.random.normal(k_b, (L,), dtype=jnp.float32) * 0.02

    out = nsp_prediction_head(pooled_output, weight, bias)
    out = jax.block_until_ready(out)

    # Reference check (plain JAX, mirrors PyTorch Linear semantics)
    ref = pooled_output @ weight.T + bias
    assert out.shape == (B, L)
    assert jnp.allclose(out, ref, atol=1e-5, rtol=1e-5), "mismatch vs reference"
    print("KERNEL_OK")
</pallas_src>

<mosaic_0001>
module attributes {stable_mosaic.version = 11 : i64} {
  func.func @nsp_head_kernel(%arg0: i32, %arg1: memref<2x32xf32, #tpu.memory_space<vmem>>, %arg2: memref<2x32xf32, #tpu.memory_space<vmem>>, %arg3: memref<2xf32, #tpu.memory_space<smem>>, %arg4: memref<2x2xf32, #tpu.memory_space<vmem>>) attributes {dimension_semantics = [#tpu.dimension_semantics<parallel>], iteration_bounds = array<i64: 1>, scalar_prefetch = 0 : i64, scratch_operands = 0 : i64, tpu.core_type = #tpu.core_type<tc>, window_params = [{transform_indices = @transform_0, window_bounds = array<i64: 2, 32>}, {pipeline_mode = #tpu.pipeline_mode<synchronous>, transform_indices = @transform_1, window_bounds = array<i64: 2, 32>}, {transform_indices = @transform_2, window_bounds = array<i64: 2>}, {transform_indices = @transform_3, window_bounds = array<i64: 2, 2>}]} {
    %c0 = arith.constant 0 : index
    %c0_0 = arith.constant 0 : index
    %0 = vector.load %arg1[%c0, %c0_0] : memref<2x32xf32, #tpu.memory_space<vmem>>, vector<2x32xf32>
    %c0_1 = arith.constant 0 : index
    %c0_2 = arith.constant 0 : index
    %1 = vector.load %arg2[%c0_1, %c0_2] : memref<2x32xf32, #tpu.memory_space<vmem>>, vector<2x32xf32>
    %cst = arith.constant dense<0.000000e+00> : vector<2x2xf32>
    %2 = tpu.matmul %0, %1, %cst {dimension_numbers = #tpu.dot_dimension_numbers<[1], [1], [0], [0], [0, 0, 1, 0], [], []>} : vector<2x32xf32>, vector<2x32xf32>, vector<2x2xf32> -> vector<2x2xf32>
    %3 = tpu.iota {dimensions = array<i32: 1>} : vector<2x2xi32>
    %cst_3 = arith.constant 0.000000e+00 : f32
    %4 = vector.broadcast %cst_3 : f32 to vector<2x2xf32>
    %c0_i32 = arith.constant 0 : i32
    %5 = vector.broadcast %c0_i32 : i32 to vector<2x2xi32>
    %6 = arith.cmpi eq, %3, %5 : vector<2x2xi32>
    %c0_4 = arith.constant 0 : index
    %7 = memref.load %arg3[%c0_4] : memref<2xf32, #tpu.memory_space<smem>>
    %cst_5 = arith.constant 0.000000e+00 : f32
    %8 = vector.broadcast %7 : f32 to vector<2x2xf32>
    %9 = vector.broadcast %cst_5 : f32 to vector<2x2xf32>
    %10 = arith.select %6, %8, %9 : vector<2x2xi1>, vector<2x2xf32>
    %11 = arith.addf %4, %10 : vector<2x2xf32>
    %c1_i32 = arith.constant 1 : i32
    %12 = vector.broadcast %c1_i32 : i32 to vector<2x2xi32>
    %13 = arith.cmpi eq, %3, %12 : vector<2x2xi32>
    %c1 = arith.constant 1 : index
    %14 = memref.load %arg3[%c1] : memref<2xf32, #tpu.memory_space<smem>>
    %cst_6 = arith.constant 0.000000e+00 : f32
    %15 = vector.broadcast %14 : f32 to vector<2x2xf32>
    %16 = vector.broadcast %cst_6 : f32 to vector<2x2xf32>
    %17 = arith.select %13, %15, %16 : vector<2x2xi1>, vector<2x2xf32>
    %18 = arith.addf %11, %17 : vector<2x2xf32>
    %19 = arith.addf %2, %18 : vector<2x2xf32>
    %c0_7 = arith.constant 0 : index
    %c0_8 = arith.constant 0 : index
    %20 = vector.load %arg4[%c0_7, %c0_8] : memref<2x2xf32, #tpu.memory_space<vmem>>, vector<2x2xf32>
    tpu.vector_store %arg4[%c0_7, %c0_8], %19 {strides = array<i32>} : memref<2x2xf32, #tpu.memory_space<vmem>>, vector<2x2xf32>,
    return
  }
  func.func @transform_0(%arg0: i32) -> (i32, i32) {
    %c0_i32 = arith.constant 0 : i32
    %c0_i32_0 = arith.constant 0 : i32
    return %arg0, %c0_i32 : i32, i32
  }
  func.func @transform_1(%arg0: i32) -> (i32, i32) {
    %c0_i32 = arith.constant 0 : i32
    %c0_i32_0 = arith.constant 0 : i32
    %c0_i32_1 = arith.constant 0 : i32
    return %c0_i32, %c0_i32_0 : i32, i32
  }
  func.func @transform_2(%arg0: i32) -> i32 {
    %c0_i32 = arith.constant 0 : i32
    %c0_i32_0 = arith.constant 0 : i32
    return %c0_i32 : i32
  }
  func.func @transform_3(%arg0: i32) -> (i32, i32) {
    %c0_i32 = arith.constant 0 : i32
    %c0_i32_0 = arith.constant 0 : i32
    return %arg0, %c0_i32 : i32, i32
  }
}

</mosaic_0001>

<llo_original>
// kernel: nsp_prediction_head.1
$region0: #{nsp_prediction_head.1}
  #allocation0 [shape = 'u32[]', space=smem, size = 0x4, offset = 0x4, fixed_abs, tag = 'smem constant byte address 0x4 - core index']
  #allocation1 [shape = 'u32[144,128]{1,0:T(1,128)}', space=vmem, size = 0x12000, scoped, tag = 'internal scratch']
  %s0 = inlined_call_operand.hbm [shape: f32[2,32], index: 0, kind: input, shape index: {}]
  %s1 = inlined_call_operand.vmem [shape: f32[2,32], index: 1, kind: input, shape index: {}]
  %s2 = inlined_call_operand.vmem [shape: f32[2], index: 2, kind: input, shape index: {}]
  %s3 = inlined_call_operand.hbm [shape: f32[2,2], index: 3, kind: output, shape index: {}]
  %s4 = sld [smem:[#allocation0]]
  $region30: #{nsp_prediction_head.1} parent=0
    _
  %s6 = ssub.s32 1, %s4
  %s7 = scalar_select 0, %s6, %s4
  $region1: #{nsp_prediction_head.1} parent=0
    #allocation2 [shape = 'u8[1024]{0}', space=vmem, size = 0x400, scoped, tag = 'input window, operand 0, single buffered']
    #allocation3 [shape = 's32[1]{0}', space=sflag, size = 0x4, scoped, tag = 'scoped memory for nsp_prediction_head.1']
    #allocation4 [shape = 's32[1]{0}', space=sflag, size = 0x4, scoped, tag = 'scoped memory for nsp_prediction_head.1']
    #allocation5 [shape = 's32[1]{0}', space=sflag, size = 0x4, scoped, tag = 'scoped memory for nsp_prediction_head.1']
    #allocation6 [shape = 'u8[512]{0}', space=smem, size = 0x200, scoped, tag = 'input window, operand 2, single buffered']
    #allocation7 [shape = 'u8[1024]{0}', space=vmem, size = 0x400, scoped, tag = 'output window, operand 0, single buffered']
    %8 = vsyncpa [#allocation3], 0
    %9 = vsyncpa [#allocation5], 0
    %10 = vsyncpa [#allocation4], 0
    // Predicated region
    $region2: #{nsp_prediction_head.1} parent=1 // pred_check
      _
    $region3: #{nsp_prediction_head.1} parent=1 // pred_check_branch
      %12 = sbr.rel (0) target = $region5
    $region4: #{nsp_prediction_head.1} parent=1 // pred_region
      %s14 = ssub.s32 32, 32
      %15 = vsyncadd [#allocation3], %s14
      %s17 = sshll.u32 [#allocation2], 4
      %s18 = int_to_ptr.vmem [resolvable:$true] %s17
      %20 = dma.hbm_to_vmem [thread:$0]  %s0, 32, %s18, [#allocation3]
    $region5: #{nsp_prediction_head.1} parent=1 // pred_fallthru
      _
    // Predicated region
    $region6: #{nsp_prediction_head.1} parent=1 // pred_check
      _
    $region7: #{nsp_prediction_head.1} parent=1 // pred_check_branch
      %22 = sbr.rel (0) target = $region9
    $region8: #{nsp_prediction_head.1} parent=1 // pred_region
      _
    $region9: #{nsp_prediction_head.1} parent=1 // pred_fallthru
      _
    // Predicated region
    $region10: #{nsp_prediction_head.1} parent=1 // pred_check
      _
    $region11: #{nsp_prediction_head.1} parent=1 // pred_check_branch
      %24 = sbr.rel (0) target = $region13
    $region12: #{nsp_prediction_head.1} parent=1 // pred_region
      %s26 = ssub.s32 16, 16
      %27 = vsyncadd [#allocation5], %s26
      %s29 = sshll.u32 %s2, 4
      %s30 = int_to_ptr.vmem [resolvable:$true] %s29
      %32 = dma.vmem_to_smem %s30, 16, [#allocation6], [#allocation5]
    $region13: #{nsp_prediction_head.1} parent=1 // pred_fallthru
      _
    // Predicated region
    $region14: #{nsp_prediction_head.1} parent=1 // pred_check
      _
    $region15: #{nsp_prediction_head.1} parent=1 // pred_check_branch
      %34 = sbr.rel (0) target = $region17
    $region16: #{nsp_prediction_head.1} parent=1 // pred_region
      %35 = dma.done [#allocation3], 32
    $region17: #{nsp_prediction_head.1} parent=1 // pred_fallthru
      _
    // Predicated region
    $region18: #{nsp_prediction_head.1} parent=1 // pred_check
      _
    $region19: #{nsp_prediction_head.1} parent=1 // pred_check_branch
      %37 = sbr.rel (0) target = $region21
    $region20: #{nsp_prediction_head.1} parent=1 // pred_region
      %38 = dma.done [#allocation5], 16
    $region21: #{nsp_prediction_head.1} parent=1 // pred_fallthru
      _
    %39 = sfence
    %v40 = vld [vmem:[#allocation2] sm:$0x3]
    %v41 = vld [vmem:[%s1] sm:$0x3]
    %v42 = vlaneseq
    %v43 = vand.u32 %v42, 127
    %vm44 = vcmp.eq.s32.totalorder %v43, 0
    %s45 = sld [smem:[#allocation6]]
    %v46 = vstv %s45
    %v47 = vsel %vm44, %v46, 0.0
    %v48 = vadd.f32 %v47, 0.0
    %vm49 = vcmp.eq.s32.totalorder %v43, 1
    %s50 = sld [smem:[#allocation6 + $0x1]]
    %v51 = vstv %s50
    %v52 = vsel %vm49, %v51, 0.0
    %v53 = vadd.f32 %v48, %v52
    %vm54 = vcmask 261120
    %v56 = vsel %vm54, %v40, 0
    %v59 = vsel %vm54, %v41, 0
    %61 = vmatprep.subr.mxu0 0.0
    %62 = vmatpush1.xpose.msra.mxu0 %v59
    %63 = vmatprep.subr.mxu0 0.0
    %64 = vmatpush1.xpose.msra.mxu0 0.0
    %65 = vmatprep.subr.mxu0 0.0
    %66 = vmatpush1.xpose.msra.mxu0 0.0
    %67 = vmatprep.subr.mxu0 0.0
    %68 = vmatpush1.xpose.msra.mxu0 0.0
    %69 = vmatprep.subr.mxu0 0.0
    %70 = vmatpush1.xpose.msra.mxu0 0.0
    %71 = vmatprep.subr.mxu0 0.0
    %72 = vmatpush1.xpose.msra.mxu0 0.0
    %73 = vmatprep.subr.mxu0 0.0
    %74 = vmatpush1.xpose.msra.mxu0 0.0
    %75 = vmatprep.subr.mxu0 0.0
    %76 = vmatpush1.xpose.msra.mxu0 0.0
    %77 = vmatprep.subr.mxu0 0.0
    %78 = vmatpush1.xpose.msra.mxu0 0.0
    %79 = vmatprep.subr.mxu0 0.0
    %80 = vmatpush1.xpose.msra.mxu0 0.0
    %81 = vmatprep.subr.mxu0 0.0
    %82 = vmatpush1.xpose.msra.mxu0 0.0
    %83 = vmatprep.subr.mxu0 0.0
    %84 = vmatpush1.xpose.msra.mxu0 0.0
    %85 = vmatprep.subr.mxu0 0.0
    %86 = vmatpush1.xpose.msra.mxu0 0.0
    %87 = vmatprep.subr.mxu0 0.0
    %88 = vmatpush1.xpose.msra.mxu0 0.0
    %89 = vmatprep.subr.mxu0 0.0
    %90 = vmatpush1.xpose.msra.mxu0 0.0
    %91 = vmatprep.subr.mxu0 0.0
    %92 = vmatpush1.xpose.msra.mxu0 0.0
    %93 = vmatprep.subr.mxu0 0.0
    %94 = vmatpush1.xpose.msra.mxu0 0.0
    %95 = vmatprep.subr.mxu0 0.0
    %96 = vmatpush1.xpose.msra.mxu0 0.0
    %97 = vmatprep.subr.mxu0 0.0
    %98 = vmatpush1.xpose.msra.mxu0 0.0
    %99 = vmatprep.subr.mxu0 0.0
    %100 = vmatpush1.xpose.msra.mxu0 0.0
    %101 = vmatprep.subr.mxu0 0.0
    %102 = vmatpush1.xpose.msra.mxu0 0.0
    %103 = vmatprep.subr.mxu0 0.0
    %104 = vmatpush1.xpose.msra.mxu0 0.0
    %105 = vmatprep.subr.mxu0 0.0
    %106 = vmatpush1.xpose.msra.mxu0 0.0
    %107 = vmatprep.subr.mxu0 0.0
    %108 = vmatpush1.xpose.msra.mxu0 0.0
    %109 = vmatprep.subr.mxu0 0.0
    %110 = vmatpush1.xpose.msra.mxu0 0.0
    %111 = vmatprep.subr.mxu0 0.0
    %112 = vmatpush1.xpose.msra.mxu0 0.0
    %113 = vmatprep.subr.mxu0 0.0
    %114 = vmatpush1.xpose.msra.mxu0 0.0
    %115 = vmatprep.subr.mxu0 0.0
    %116 = vmatpush1.xpose.msra.mxu0 0.0
    %117 = vmatprep.subr.mxu0 0.0
    %118 = vmatpush1.xpose.msra.mxu0 0.0
    %119 = vmatprep.subr.mxu0 0.0
    %120 = vmatpush1.xpose.msra.mxu0 0.0
    %121 = vmatprep.subr.mxu0 0.0
    %122 = vmatpush1.xpose.msra.mxu0 0.0
    %123 = vmatprep.subr.mxu0 0.0
    %124 = vmatpush1.xpose.msra.mxu0 0.0
    %125 = vmatprep.mubr.f32.mxu0 0.0
    %126 = vmatmul.mubr.f32.gmra.mrb[0].mxu0 %v56
    %v127 = vpop.f32.mrb[0].mxu0
    %v128 = vadd.f32 %v53, %v127
    %v129 = vpop.f32.mrb[0].mxu0
    %130 = vdwg.mxu0
    %vm131 = vcmask 9216
    %132 = vst.msk [vmem:[#allocation7] sm:$0x3] %vm131, %v128
    // Predicated region
    $region22: #{nsp_prediction_head.1} parent=1 // pred_check
      _
    $region23: #{nsp_prediction_head.1} parent=1 // pred_check_branch
      %134 = sbr.rel (0) target = $region25
    $region24: #{nsp_prediction_head.1} parent=1 // pred_region
      %s136 = ssub.s32 32, 32
      %137 = vsyncadd [#allocation4], %s136
      %s139 = sshll.u32 [#allocation7], 4
      %s140 = int_to_ptr.vmem [resolvable:$true] %s139
      %142 = dma.vmem_to_hbm [thread:$0]  %s140, 32, %s3, [#allocation4]
    $region25: #{nsp_prediction_head.1} parent=1 // pred_fallthru
      _
    // Predicated region
    $region26: #{nsp_prediction_head.1} parent=1 // pred_check
      _
    $region27: #{nsp_prediction_head.1} parent=1 // pred_check_branch
      %144 = sbr.rel (0) target = $region29
    $region28: #{nsp_prediction_head.1} parent=1 // pred_region
      %145 = dma.done [#allocation4], 32
    $region29: #{nsp_prediction_head.1} parent=1 // pred_fallthru
      _
    %146 = vsyncpa [#allocation3], 1
    %147 = vsyncpa [#allocation4], 1
    %148 = vsyncpa [#allocation5], 1

</llo_original>
